<compile_context>
chip_gen: v6e
topology: v6e:2x2x1
jax: 0.10.0
libtpu: 0.0.40
codegen_flags: <defaults>
</compile_context>

<pallas_src>
import functools

import jax
import jax.numpy as jnp
from jax.experimental import pallas as pl
from jax.experimental.pallas import tpu as pltpu

_LANES = 128   # lane-dense column width
_SLAB = 256    # rows per in-kernel accumulation slab


def _cdiv(a, b):
    return -(-a // b)


def _round_up(a, m):
    return _cdiv(a, m) * m


def _vmem_limit_bytes():
    """Generation-aware scoped-VMEM limit (v5e/v6e: 128 MiB phys, v7x: 64 MiB)."""
    cap = 64 * 1024 * 1024
    try:
        info = pltpu.get_tpu_info()
        cap = int(getattr(info, "vmem_capacity_bytes", cap) or cap)
    except Exception:
        pass
    # ~64 MiB on the 128-MiB parts, ~48 MiB on the 64-MiB part, never below 32.
    return max(32 * 1024 * 1024, min(3 * cap // 4, 64 * 1024 * 1024))


def _focal_weight(one_minus_pt, gamma):
    """(1 - pt) ** gamma with transcendental-free paths for common gammas."""
    g = float(gamma)
    if g == 0.0:
        return jnp.ones_like(one_minus_pt)
    gi = int(g)
    frac = g - gi
    if g > 0.0 and gi <= 8 and frac in (0.0, 0.5):
        if gi == 0:                       # gamma == 0.5
            return jnp.sqrt(one_minus_pt)
        fw = one_minus_pt
        for _ in range(gi - 1):           # repeated multiply, no exp/log
            fw = fw * one_minus_pt
        if frac == 0.5:
            fw = fw * jnp.sqrt(one_minus_pt)
        return fw
    # Generic gamma via exp(g * log(.)), guarded at 0.
    tiny = jnp.finfo(jnp.float32).tiny
    return jnp.where(one_minus_pt > 0.0,
                     jnp.exp(g * jnp.log(jnp.maximum(one_minus_pt, tiny))),
                     0.0)


def _focal_partial_kernel(x_ref, t_ref, o_ref, *, alpha, gamma, total_rows,
                          tile_rows, slab, needs_mask, approx_recip):
    """Writes an (8, 128) f32 partial sum of the focal loss for this row tile."""
    n_slabs = tile_rows // slab
    lanes = x_ref.shape[-1]
    tile_row0 = pl.program_id(0) * tile_rows

    def slab_partial(k):
        r0 = k * slab
        if not isinstance(r0, int):
            r0 = pl.multiple_of(r0, slab)
        x = x_ref[pl.ds(r0, slab), :].astype(jnp.float32)
        t = t_ref[pl.ds(r0, slab), :].astype(jnp.float32)

        # One EUP exp per element, reused by both the stable BCE and sigmoid.
        e = jnp.exp(-jnp.abs(x))
        # bce = max(x, 0) - x*t + log(1 + exp(-|x|))  (PyTorch's stable form)
        bce = jnp.maximum(x, 0.0) - x * t + jnp.log1p(e)

        denom = 1.0 + e
        recip = pl.reciprocal(denom, approx=True) if approx_recip else 1.0 / denom
        probs = jnp.where(x >= 0.0, recip, e * recip)

        # Exact compare, same as torch.where(targets == 1, ...) in the module.
        is_pos = t == 1.0
        pt = jnp.where(is_pos, probs, 1.0 - probs)
        # Clamp protects the sqrt path against tiny negatives from approx recip.
        one_minus_pt = jnp.maximum(1.0 - pt, 0.0)
        fw = _focal_weight(one_minus_pt, gamma)
        alpha_t = jnp.where(is_pos, alpha, 1.0 - alpha)
        focal = alpha_t * fw * bce

        if needs_mask:
            # Rows past the end of the array hold garbage VMEM; select them
            # away with a (slab, 1) iota (broadcast over lanes by the where).
            row_idx = jax.lax.broadcasted_iota(jnp.int32, (slab, 1), 0)
            limit = total_rows - (tile_row0 + k * slab)
            focal = jnp.where(row_idx < limit, focal, 0.0)

        # (slab, lanes) -> (8, lanes): pure VPU vreg adds, no cross-lane work.
        return focal.reshape(slab // 8, 8, lanes).sum(axis=0)

    acc = slab_partial(0)
    if n_slabs > 1:
        acc = jax.lax.fori_loop(1, n_slabs,
                                lambda k, a: a + slab_partial(k), acc,
                                unroll=2)
    o_ref[...] = acc


def focal_loss(inputs, targets, *, alpha=0.25, gamma=2.0, reduction="mean",
               approx_reciprocal=False):
    """Pallas TPU focal loss matching the PyTorch FocalLoss module.

    inputs/targets: same (arbitrary) shape; any dtype (math is f32 inside).
    reduction: 'mean' | 'sum'.  Returns an f32 scalar.
    """
    if inputs.shape != targets.shape:
        raise ValueError("inputs and targets must have the same shape")
    if reduction not in ("mean", "sum"):
        # TODO(synk): reduction='none' (per-element loss output) not implemented.
        raise NotImplementedError("reduction must be 'mean' or 'sum'")

    n_elems = int(inputs.size)
    x = inputs.reshape(-1)
    t = targets.reshape(-1)

    # Lane-dense layout: (rows, 128).  Pad the tail (rare path) with values
    # whose focal contribution is exactly zero: x = +big, t = 1 -> bce == 0.
    pad = (-n_elems) % _LANES
    if pad:
        if jnp.issubdtype(x.dtype, jnp.floating):
            big = float(jnp.finfo(x.dtype).max) / 2
        else:
            big = int(jnp.iinfo(x.dtype).max)
        x = jnp.concatenate([x, jnp.full((pad,), big, x.dtype)])
        t = jnp.concatenate([t, jnp.ones((pad,), t.dtype)])
    rows = (n_elems + pad) // _LANES
    x2 = x.reshape(rows, _LANES)
    t2 = t.reshape(rows, _LANES)

    x_item = jnp.dtype(x2.dtype).itemsize
    t_item = jnp.dtype(t2.dtype).itemsize
    row_bytes = _LANES * (x_item + t_item)
    vmem_limit = _vmem_limit_bytes()

    # --- Tile sizing --------------------------------------------------------
    # ~4 MiB of DMA per input per grid step (>> the ~0.35 us fixed step cost),
    target_rows = max(_SLAB, (4 * 1024 * 1024) // (_LANES * max(x_item, t_item)))
    # double-buffered inputs must fit comfortably under the scoped VMEM limit
    # (the slab loop keeps all other intermediates at vreg scale),
    vmem_rows = max(32, (6 * vmem_limit // 10) // (2 * row_bytes))
    # and no larger than the problem itself.
    tile_rows = min(target_rows, vmem_rows, _round_up(rows, 32))
    # Keep both v7x TensorCores busy: >= 2 roughly balanced tiles whenever each
    # half still moves >= ~2 MiB.
    half_rows = _round_up(_cdiv(rows, 2), 32)
    if half_rows * row_bytes >= 2 * 1024 * 1024:
        tile_rows = min(tile_rows, half_rows)
    # Quantize: multiple of the slab when large, of 32 otherwise (legal sublane
    # tiling for f32 / bf16 / int8 blocks).
    if tile_rows >= _SLAB:
        tile_rows = (tile_rows // _SLAB) * _SLAB
        slab = _SLAB
    else:
        tile_rows = _round_up(tile_rows, 32)
        slab = tile_rows

    grid = _cdiv(rows, tile_rows)
    needs_mask = grid * tile_rows != rows

    kernel = functools.partial(
        _focal_partial_kernel,
        alpha=float(alpha), gamma=float(gamma), total_rows=rows,
        tile_rows=tile_rows, slab=slab, needs_mask=needs_mask,
        approx_recip=bool(approx_reciprocal),
    )

    g = float(gamma)
    gi, frac = int(g), g - int(g)
    if g == 0.0 or (g > 0.0 and gi <= 8 and frac == 0.0):
        extra_trans = 0
    elif g > 0.0 and gi <= 8 and frac == 0.5:
        extra_trans = 1
    else:
        extra_trans = 2
    cost = pl.CostEstimate(
        flops=16 * rows * _LANES,
        transcendentals=(2 + extra_trans) * rows * _LANES,
        bytes_accessed=rows * row_bytes + grid * 8 * _LANES * 4,
    )

    partials = pl.pallas_call(
        kernel,
        out_shape=jax.ShapeDtypeStruct((grid * 8, _LANES), jnp.float32),
        grid=(grid,),
        # NOTE: if a profile ever shows exposed DMA at step boundaries on v7x,
        # sweep pipeline_mode=pl.Buffered(3) on these two specs.
        in_specs=[
            pl.BlockSpec((tile_rows, _LANES), lambda i: (i, 0)),
            pl.BlockSpec((tile_rows, _LANES), lambda i: (i, 0)),
        ],
        out_specs=pl.BlockSpec((8, _LANES), lambda i: (i, 0)),
        compiler_params=pltpu.CompilerParams(
            # Per-tile partial sums are independent -> the grid axis can be
            # sharded across v7x's two TensorCores; neutral on v5e/v6e.
            dimension_semantics=("parallel",),
            vmem_limit_bytes=vmem_limit,
        ),
        cost_estimate=cost,
    )(x2, t2)

    total = jnp.sum(partials)
    if reduction == "mean":
        return total / float(n_elems)
    return total


def _focal_loss_ref(inputs, targets, alpha=0.25, gamma=2.0, reduction="mean"):
    x = inputs.astype(jnp.float32)
    t = targets.astype(jnp.float32)
    bce = jnp.maximum(x, 0.0) - x * t + jnp.log1p(jnp.exp(-jnp.abs(x)))
    p = jax.nn.sigmoid(x)
    pt = jnp.where(t == 1.0, p, 1.0 - p)
    fw = (1.0 - pt) ** gamma
    at = jnp.where(t == 1.0, alpha, 1.0 - alpha)
    fl = at * fw * bce
    return jnp.mean(fl) if reduction == "mean" else jnp.sum(fl)


if __name__ == "__main__":
    key = jax.random.PRNGKey(0)
    k1, k2 = jax.random.split(key)

    B, C = 16, 128  # [batch, num_classes]
    logits = jax.random.normal(k1, (B, C), dtype=jnp.float32) * 3.0
    targets = (jax.random.uniform(k2, (B, C)) < 0.3).astype(jnp.float32)

    # mean reduction, f32 inputs (exercises the masked-tail path: 16 rows
    # inside a 32-row tile).
    loss = jax.block_until_ready(focal_loss(logits, targets, alpha=0.25, gamma=2.0))
    ref = _focal_loss_ref(logits, targets)
    assert jnp.allclose(loss, ref, rtol=1e-5, atol=1e-6), (loss, ref)

    # narrow-dtype path (bf16 logits + int8 targets -> ~2.5x less HBM traffic).
    loss_n = jax.block_until_ready(
        focal_loss(logits.astype(jnp.bfloat16), targets.astype(jnp.int8)))
    ref_n = _focal_loss_ref(logits.astype(jnp.bfloat16).astype(jnp.float32), targets)
    assert jnp.allclose(loss_n, ref_n, rtol=1e-4, atol=1e-5), (loss_n, ref_n)

    # sum reduction.
    loss_s = jax.block_until_ready(focal_loss(logits, targets, reduction="sum"))
    ref_s = _focal_loss_ref(logits, targets, reduction="sum")
    assert jnp.allclose(loss_s, ref_s, rtol=1e-5, atol=1e-3), (loss_s, ref_s)

    # odd element count (N % 128 != 0 -> wrapper pads with zero-contribution
    # values) + half-integer gamma (sqrt fast path, no exp/log).
    B2, C2 = 10, 20
    logits2 = jax.random.normal(k1, (B2, C2), dtype=jnp.float32)
    targets2 = (jax.random.uniform(k2, (B2, C2)) < 0.5).astype(jnp.float32)
    loss2 = jax.block_until_ready(focal_loss(logits2, targets2, gamma=1.5))
    ref2 = _focal_loss_ref(logits2, targets2, gamma=1.5)
    assert jnp.allclose(loss2, ref2, rtol=1e-5, atol=1e-6), (loss2, ref2)

    # approx-reciprocal knob (saves the exact-divide EUP refinement on v7x /
    # narrow-dtype paths); tolerance loosened accordingly.
    loss_a = jax.block_until_ready(focal_loss(logits, targets, approx_reciprocal=True))
    assert jnp.allclose(loss_a, ref, rtol=5e-3, atol=1e-4), (loss_a, ref)

    print("KERNEL_OK")
</pallas_src>

<mosaic_0001>
module attributes {stable_mosaic.version = 11 : i64} {
  func.func @_focal_partial_kernel(%arg0: i32, %arg1: memref<32x128xf32, #tpu.memory_space<vmem>>, %arg2: memref<32x128xf32, #tpu.memory_space<vmem>>, %arg3: memref<8x128xf32, #tpu.memory_space<vmem>>) attributes {dimension_semantics = [#tpu.dimension_semantics<parallel>], iteration_bounds = array<i64: 1>, scalar_prefetch = 0 : i64, scratch_operands = 0 : i64, tpu.core_type = #tpu.core_type<tc>, window_params = [{transform_indices = @transform_0, window_bounds = array<i64: 32, 128>}, {transform_indices = @transform_1, window_bounds = array<i64: 32, 128>}, {transform_indices = @transform_2, window_bounds = array<i64: 8, 128>}]} {
    %c32_i32 = arith.constant 32 : i32
    %0 = arith.muli %arg0, %c32_i32 : i32
    %c0 = arith.constant 0 : index
    %c0_0 = arith.constant 0 : index
    %1 = vector.load %arg1[%c0, %c0_0] : memref<32x128xf32, #tpu.memory_space<vmem>>, vector<32x128xf32>
    %c0_1 = arith.constant 0 : index
    %c0_2 = arith.constant 0 : index
    %2 = vector.load %arg2[%c0_1, %c0_2] : memref<32x128xf32, #tpu.memory_space<vmem>>, vector<32x128xf32>
    %3 = math.absf %1 : vector<32x128xf32>
    %cst = arith.constant 0.000000e+00 : f32
    %4 = vector.broadcast %cst : f32 to vector<32x128xf32>
    %5 = arith.subf %4, %3 : vector<32x128xf32>
    %6 = math.exp %5 : vector<32x128xf32>
    %cst_3 = arith.constant 0.000000e+00 : f32
    %7 = vector.broadcast %cst_3 : f32 to vector<32x128xf32>
    %8 = arith.maximumf %1, %7 : vector<32x128xf32>
    %9 = arith.mulf %1, %2 : vector<32x128xf32>
    %10 = arith.subf %8, %9 : vector<32x128xf32>
    %11 = math.log1p %6 : vector<32x128xf32>
    %12 = arith.addf %10, %11 : vector<32x128xf32>
    %cst_4 = arith.constant 1.000000e+00 : f32
    %13 = vector.broadcast %cst_4 : f32 to vector<32x128xf32>
    %14 = arith.addf %13, %6 : vector<32x128xf32>
    %cst_5 = arith.constant 1.000000e+00 : f32
    %15 = vector.broadcast %cst_5 : f32 to vector<32x128xf32>
    %16 = arith.divf %15, %14 : vector<32x128xf32>
    %cst_6 = arith.constant 0.000000e+00 : f32
    %17 = vector.broadcast %cst_6 : f32 to vector<32x128xf32>
    %18 = arith.cmpf oge, %1, %17 : vector<32x128xf32>
    %19 = arith.mulf %6, %16 : vector<32x128xf32>
    %20 = arith.select %18, %16, %19 : vector<32x128xi1>, vector<32x128xf32>
    %cst_7 = arith.constant 1.000000e+00 : f32
    %21 = vector.broadcast %cst_7 : f32 to vector<32x128xf32>
    %22 = arith.cmpf oeq, %2, %21 : vector<32x128xf32>
    %cst_8 = arith.constant 1.000000e+00 : f32
    %23 = vector.broadcast %cst_8 : f32 to vector<32x128xf32>
    %24 = arith.subf %23, %20 : vector<32x128xf32>
    %25 = arith.select %22, %20, %24 : vector<32x128xi1>, vector<32x128xf32>
    %cst_9 = arith.constant 1.000000e+00 : f32
    %26 = vector.broadcast %cst_9 : f32 to vector<32x128xf32>
    %27 = arith.subf %26, %25 : vector<32x128xf32>
    %cst_10 = arith.constant 0.000000e+00 : f32
    %28 = vector.broadcast %cst_10 : f32 to vector<32x128xf32>
    %29 = arith.maximumf %27, %28 : vector<32x128xf32>
    %30 = arith.mulf %29, %29 : vector<32x128xf32>
    %cst_11 = arith.constant 2.500000e-01 : f32
    %cst_12 = arith.constant 7.500000e-01 : f32
    %31 = vector.broadcast %cst_11 : f32 to vector<32x128xf32>
    %32 = vector.broadcast %cst_12 : f32 to vector<32x128xf32>
    %33 = arith.select %22, %31, %32 : vector<32x128xi1>, vector<32x128xf32>
    %34 = arith.mulf %33, %30 : vector<32x128xf32>
    %35 = arith.mulf %34, %12 : vector<32x128xf32>
    %36 = tpu.iota {dimensions = array<i32: 0>} : vector<32x1xi32>
    %c0_i32 = arith.constant 0 : i32
    %37 = arith.addi %0, %c0_i32 : i32
    %c16_i32 = arith.constant 16 : i32
    %38 = arith.subi %c16_i32, %37 : i32
    %39 = vector.broadcast %38 : i32 to vector<32x1xi32>
    %40 = arith.cmpi slt, %36, %39 : vector<32x1xi32>
    %cst_13 = arith.constant 0.000000e+00 : f32
    %41 = vector.shape_cast %40 : vector<32x1xi1> to vector<32x1xi1>
    %42 = vector.broadcast %41 : vector<32x1xi1> to vector<32x128xi1>
    %43 = vector.broadcast %cst_13 : f32 to vector<32x128xf32>
    %44 = arith.select %42, %35, %43 : vector<32x128xi1>, vector<32x128xf32>
    %45 = vector.shape_cast %44 : vector<32x128xf32> to vector<4x8x128xf32>
    %cst_14 = arith.constant dense<0.000000e+00> : vector<8x128xf32>
    %46 = vector.multi_reduction <add>, %45, %cst_14 [0] : vector<4x8x128xf32> to vector<8x128xf32>
    %c0_15 = arith.constant 0 : index
    %c0_16 = arith.constant 0 : index
    %47 = vector.load %arg3[%c0_15, %c0_16] : memref<8x128xf32, #tpu.memory_space<vmem>>, vector<8x128xf32>
    tpu.vector_store %arg3[%c0_15, %c0_16], %46 {strides = array<i32>} : memref<8x128xf32, #tpu.memory_space<vmem>>, vector<8x128xf32>,
    return
  }
  func.func @transform_0(%arg0: i32) -> (i32, i32) {
    %c0_i32 = arith.constant 0 : i32
    %c0_i32_0 = arith.constant 0 : i32
    return %arg0, %c0_i32 : i32, i32
  }
  func.func @transform_1(%arg0: i32) -> (i32, i32) {
    %c0_i32 = arith.constant 0 : i32
    %c0_i32_0 = arith.constant 0 : i32
    return %arg0, %c0_i32 : i32, i32
  }
  func.func @transform_2(%arg0: i32) -> (i32, i32) {
    %c0_i32 = arith.constant 0 : i32
    %c0_i32_0 = arith.constant 0 : i32
    return %arg0, %c0_i32 : i32, i32
  }
}

</mosaic_0001>

<llo_original>
// kernel: tpu_custom_call.1
$region0: #{tpu_custom_call.1}
  #allocation0 [shape = 'u32[]', space=smem, size = 0x4, offset = 0x4, fixed_abs, tag = 'smem constant byte address 0x4 - core index']
  #allocation1 [shape = 'u32[144,128]{1,0:T(1,128)}', space=vmem, size = 0x12000, scoped, tag = 'internal scratch']
  %s0 = inlined_call_operand.hbm [shape: f32[16,128], index: 0, kind: input, shape index: {}]
  %s1 = inlined_call_operand.hbm [shape: f32[16,128], index: 1, kind: input, shape index: {}]
  %s2 = inlined_call_operand.hbm [shape: f32[8,128], index: 2, kind: output, shape index: {}]
  %s3 = sld [smem:[#allocation0]]
  $region26: #{tpu_custom_call.1} parent=0
    _
  %s5 = ssub.s32 1, %s3
  %s6 = scalar_select 0, %s5, %s3
  $region1: #{tpu_custom_call.1} parent=0
    #allocation2 [shape = 'u8[16384]{0}', space=vmem, size = 0x4000, scoped, tag = 'input window, operand 0, single buffered']
    #allocation3 [shape = 's32[1]{0}', space=sflag, size = 0x4, scoped, tag = 'scoped memory for tpu_custom_call.1']
    #allocation4 [shape = 's32[1]{0}', space=sflag, size = 0x4, scoped, tag = 'scoped memory for tpu_custom_call.1']
    #allocation5 [shape = 'u8[16384]{0}', space=vmem, size = 0x4000, scoped, tag = 'input window, operand 1, single buffered']
    #allocation6 [shape = 's32[1]{0}', space=sflag, size = 0x4, scoped, tag = 'scoped memory for tpu_custom_call.1']
    #allocation7 [shape = 'u8[4096]{0}', space=vmem, size = 0x1000, scoped, tag = 'output window, operand 0, single buffered']
    %7 = vsyncpa [#allocation3], 0
    %8 = vsyncpa [#allocation6], 0
    %9 = vsyncpa [#allocation4], 0
    // Predicated region
    $region2: #{tpu_custom_call.1} parent=1 // pred_check
      _
    $region3: #{tpu_custom_call.1} parent=1 // pred_check_branch
      %11 = sbr.rel (0) target = $region5
    $region4: #{tpu_custom_call.1} parent=1 // pred_region
      %s13 = ssub.s32 512, 256
      %14 = vsyncadd [#allocation3], %s13
      %s15 = sshll.u32 [#allocation2], 4
      %s16 = int_to_ptr.vmem [resolvable:$true] %s15
      %21 = dma.hbm_to_vmem [thread:$0]  %s0, 256, %s16, [#allocation3], 128, 128, 8
    $region5: #{tpu_custom_call.1} parent=1 // pred_fallthru
      _
    // Predicated region
    $region6: #{tpu_custom_call.1} parent=1 // pred_check
      _
    $region7: #{tpu_custom_call.1} parent=1 // pred_check_branch
      %23 = sbr.rel (0) target = $region9
    $region8: #{tpu_custom_call.1} parent=1 // pred_region
      %s25 = ssub.s32 512, 256
      %26 = vsyncadd [#allocation6], %s25
      %s27 = sshll.u32 [#allocation5], 4
      %s28 = int_to_ptr.vmem [resolvable:$true] %s27
      %33 = dma.hbm_to_vmem [thread:$0]  %s1, 256, %s28, [#allocation6], 128, 128, 8
    $region9: #{tpu_custom_call.1} parent=1 // pred_fallthru
      _
    // Predicated region
    $region10: #{tpu_custom_call.1} parent=1 // pred_check
      _
    $region11: #{tpu_custom_call.1} parent=1 // pred_check_branch
      %35 = sbr.rel (0) target = $region13
    $region12: #{tpu_custom_call.1} parent=1 // pred_region
      %36 = dma.done [#allocation3], 512
    $region13: #{tpu_custom_call.1} parent=1 // pred_fallthru
      _
    // Predicated region
    $region14: #{tpu_custom_call.1} parent=1 // pred_check
      _
    $region15: #{tpu_custom_call.1} parent=1 // pred_check_branch
      %38 = sbr.rel (0) target = $region17
    $region16: #{tpu_custom_call.1} parent=1 // pred_region
      %39 = dma.done [#allocation6], 512
    $region17: #{tpu_custom_call.1} parent=1 // pred_fallthru
      _
    %s40 = smul.u32 0, 32
    %v41 = vld [vmem:[#allocation2] sm:$0xff]
    %v42 = vld [vmem:[#allocation2 + $0x8] sm:$0xff]
    %v43 = vld [vmem:[#allocation2 + $0x10] sm:$0xff]
    %v44 = vld [vmem:[#allocation2 + $0x18] sm:$0xff]
    %v45 = vld [vmem:[#allocation5] sm:$0xff]
    %v46 = vld [vmem:[#allocation5 + $0x8] sm:$0xff]
    %v47 = vld [vmem:[#allocation5 + $0x10] sm:$0xff]
    %v48 = vld [vmem:[#allocation5 + $0x18] sm:$0xff]
    %v49 = vand.u32 2147483647, %v41
    %v50 = vand.u32 2147483647, %v42
    %v51 = vand.u32 2147483647, %v43
    %v52 = vand.u32 2147483647, %v44
    %v53 = vsub.f32 0.0, %v49
    %v54 = vsub.f32 0.0, %v50
    %v55 = vsub.f32 0.0, %v51
    %v56 = vsub.f32 0.0, %v52
    %v57 = vmul.f32 %v53, 1.442695
    %v58 = vpow.pop %v57
    %v59 = vmul.f32 %v54, 1.442695
    %v60 = vpow.pop %v59
    %v61 = vmul.f32 %v55, 1.442695
    %v62 = vpow.pop %v61
    %v63 = vmul.f32 %v56, 1.442695
    %v64 = vpow.pop %v63
    %v65 = vmax.f32 %v41, 0.0
    %v66 = vmax.f32 %v42, 0.0
    %v67 = vmax.f32 %v43, 0.0
    %v68 = vmax.f32 %v44, 0.0
    %v69 = vmul.f32 %v41, %v45
    %v70 = vmul.f32 %v42, %v46
    %v71 = vmul.f32 %v43, %v47
    %v72 = vmul.f32 %v44, %v48
    %v73 = vsub.f32 %v65, %v69
    %v74 = vsub.f32 %v66, %v70
    %v75 = vsub.f32 %v67, %v71
    %v76 = vsub.f32 %v68, %v72
    %v77 = vadd.f32 %v58, 1.0
    %v78 = vlog2.pop %v77
    %v79 = vmul.f32 %v78, 0.6931472
    %v80 = vmul.f32 -0.5, %v58
    %v81 = vadd.f32 %v80, 1.0
    %v82 = vmul.f32 %v81, %v58
    %v83 = vand.u32 2147483647, %v58
    %vm84 = vcmp.lt.f32.partialorder %v83, 0.0004427343
    %v85 = vsel %vm84, %v82, %v79
    %v86 = vadd.f32 %v60, 1.0
    %v87 = vlog2.pop %v86
    %v88 = vmul.f32 %v87, 0.6931472
    %v89 = vmul.f32 -0.5, %v60
    %v90 = vadd.f32 %v89, 1.0
    %v91 = vmul.f32 %v90, %v60
    %v92 = vand.u32 2147483647, %v60
    %vm93 = vcmp.lt.f32.partialorder %v92, 0.0004427343
    %v94 = vsel %vm93, %v91, %v88
    %v95 = vadd.f32 %v62, 1.0
    %v96 = vlog2.pop %v95
    %v97 = vmul.f32 %v96, 0.6931472
    %v98 = vmul.f32 -0.5, %v62
    %v99 = vadd.f32 %v98, 1.0
    %v100 = vmul.f32 %v99, %v62
    %v101 = vand.u32 2147483647, %v62
    %vm102 = vcmp.lt.f32.partialorder %v101, 0.0004427343
    %v103 = vsel %vm102, %v100, %v97
    %v104 = vadd.f32 %v64, 1.0
    %v105 = vlog2.pop %v104
    %v106 = vmul.f32 %v105, 0.6931472
    %v107 = vmul.f32 -0.5, %v64
    %v108 = vadd.f32 %v107, 1.0
    %v109 = vmul.f32 %v108, %v64
    %v110 = vand.u32 2147483647, %v64
    %vm111 = vcmp.lt.f32.partialorder %v110, 0.0004427343
    %v112 = vsel %vm111, %v109, %v106
    %v113 = vadd.f32 %v73, %v85
    %v114 = vadd.f32 %v74, %v94
    %v115 = vadd.f32 %v75, %v103
    %v116 = vadd.f32 %v76, %v112
    %v117 = vadd.f32 %v58, 1.0
    %v118 = vadd.f32 %v60, 1.0
    %v119 = vadd.f32 %v62, 1.0
    %v120 = vadd.f32 %v64, 1.0
    %v121 = vrcp.pop %v117
    %v122 = vmul.f32 1.0, %v121
    %v123 = vrcp.pop %v118
    %v124 = vmul.f32 1.0, %v123
    %v125 = vrcp.pop %v119
    %v126 = vmul.f32 1.0, %v125
    %v127 = vrcp.pop %v120
    %v128 = vmul.f32 1.0, %v127
    %vm129 = vcmp.ge.f32.partialorder %v41, 0.0
    %vm130 = vcmp.ge.f32.partialorder %v42, 0.0
    %vm131 = vcmp.ge.f32.partialorder %v43, 0.0
    %vm132 = vcmp.ge.f32.partialorder %v44, 0.0
    %v133 = vmul.f32 %v58, %v122
    %v134 = vmul.f32 %v60, %v124
    %v135 = vmul.f32 %v62, %v126
    %v136 = vmul.f32 %v64, %v128
    %v137 = vsel %vm129, %v122, %v133
    %v138 = vsel %vm130, %v124, %v134
    %v139 = vsel %vm131, %v126, %v135
    %v140 = vsel %vm132, %v128, %v136
    %vm141 = vcmp.eq.f32.partialorder %v45, 1.0
    %vm142 = vcmp.eq.f32.partialorder %v46, 1.0
    %vm143 = vcmp.eq.f32.partialorder %v47, 1.0
    %vm144 = vcmp.eq.f32.partialorder %v48, 1.0
    %v145 = vsub.f32 1.0, %v137
    %v146 = vsub.f32 1.0, %v138
    %v147 = vsub.f32 1.0, %v139
    %v148 = vsub.f32 1.0, %v140
    %v149 = vsel %vm141, %v137, %v145
    %v150 = vsel %vm142, %v138, %v146
    %v151 = vsel %vm143, %v139, %v147
    %v152 = vsel %vm144, %v140, %v148
    %v153 = vsub.f32 1.0, %v149
    %v154 = vsub.f32 1.0, %v150
    %v155 = vsub.f32 1.0, %v151
    %v156 = vsub.f32 1.0, %v152
    %v157 = vmax.f32 %v153, 0.0
    %v158 = vmax.f32 %v154, 0.0
    %v159 = vmax.f32 %v155, 0.0
    %v160 = vmax.f32 %v156, 0.0
    %v161 = vmul.f32 %v157, %v157
    %v162 = vmul.f32 %v158, %v158
    %v163 = vmul.f32 %v159, %v159
    %v164 = vmul.f32 %v160, %v160
    %v165 = vsel %vm141, 0.25, 0.75
    %v166 = vsel %vm142, 0.25, 0.75
    %v167 = vsel %vm143, 0.25, 0.75
    %v168 = vsel %vm144, 0.25, 0.75
    %v169 = vmul.f32 %v165, %v161
    %v170 = vmul.f32 %v166, %v162
    %v171 = vmul.f32 %v167, %v163
    %v172 = vmul.f32 %v168, %v164
    %v173 = vmul.f32 %v169, %v113
    %v174 = vmul.f32 %v170, %v114
    %v175 = vmul.f32 %v171, %v115
    %v176 = vmul.f32 %v172, %v116
    %v177 = vlaneseq
    %v178 = vshrl.u32 %v177, 7
    %v179 = vadd.s32 %v178, 8
    %v180 = vadd.s32 %v178, 16
    %v181 = vadd.s32 %v178, 24
    %s182 = ssub.s32 16, %s40
    %v183 = vstv %s182
    %vm184 = vcmp.lt.s32.totalorder %v178, %v183
    %vm185 = vcmp.lt.s32.totalorder %v179, %v183
    %vm186 = vcmp.lt.s32.totalorder %v180, %v183
    %vm187 = vcmp.lt.s32.totalorder %v181, %v183
    %v188 = vsel %vm184, 1, 0
    %v189 = vsel %vm185, 1, 0
    %v190 = vsel %vm186, 1, 0
    %v191 = vsel %vm187, 1, 0
    %vm192 = vcmp.eq.s32.totalorder %v188, 1
    %vm193 = vcmp.eq.s32.totalorder %v189, 1
    %vm194 = vcmp.eq.s32.totalorder %v190, 1
    %vm195 = vcmp.eq.s32.totalorder %v191, 1
    %v196 = vsel %vm192, %v173, 0.0
    %v197 = vsel %vm193, %v174, 0.0
    %v198 = vsel %vm194, %v175, 0.0
    %v199 = vsel %vm195, %v176, 0.0
    %v200 = vadd.f32 %v196, %v197
    %v201 = vadd.f32 %v200, %v198
    %v202 = vadd.f32 %v201, %v199
    %203 = vst [vmem:[#allocation7] sm:$0xff] %v202
    // Predicated region
    $region18: #{tpu_custom_call.1} parent=1 // pred_check
      _
    $region19: #{tpu_custom_call.1} parent=1 // pred_check_branch
      %205 = sbr.rel (0) target = $region21
    $region20: #{tpu_custom_call.1} parent=1 // pred_region
      %s207 = ssub.s32 128, 128
      %208 = vsyncadd [#allocation4], %s207
      %s210 = sshll.u32 [#allocation7], 4
      %s211 = int_to_ptr.vmem [resolvable:$true] %s210
      %213 = dma.vmem_to_hbm [thread:$0]  %s211, 128, %s2, [#allocation4]
    $region21: #{tpu_custom_call.1} parent=1 // pred_fallthru
      _
    // Predicated region
    $region22: #{tpu_custom_call.1} parent=1 // pred_check
      _
    $region23: #{tpu_custom_call.1} parent=1 // pred_check_branch
      %215 = sbr.rel (0) target = $region25
    $region24: #{tpu_custom_call.1} parent=1 // pred_region
      %216 = dma.done [#allocation4], 128
    $region25: #{tpu_custom_call.1} parent=1 // pred_fallthru
      _
    %217 = vsyncpa [#allocation3], 1
    %218 = vsyncpa [#allocation6], 1
    %219 = vsyncpa [#allocation4], 1

</llo_original>
